<compile_context>
chip_gen: v7x
topology: tpu7x:2x2x1
jax: 0.10.0
libtpu: 0.0.40
codegen_flags: <defaults>
</compile_context>

<pallas_src>
import functools
import math

import jax
import jax.numpy as jnp
from jax.experimental import pallas as pl
from jax.experimental.pallas import tpu as pltpu


def _ffa_kernel(x_tile_ref, kt_ref, v_ref, wq_ref, bq_ref, out_ref, *,
                exp_dtype):
    vc = out_ref.shape[1]

    # Query projection for this q-tile (softmax scale pre-folded into Wq/bq),
    # channel-major: (C, TQ), f32 accumulation.
    q = jnp.dot(wq_ref[...], x_tile_ref[0],
                preferred_element_type=jnp.float32) + bq_ref[...]

    # scores[t, k] = sum_c q[c, t] * kT[c, k]  -> (TQ, HW); bf16 operands,
    # f32 accumulation on the MXU (no explicit transpose: contraction dims).
    scores = jax.lax.dot_general(
        q.astype(jnp.bfloat16), kt_ref[0],
        dimension_numbers=(((0,), (0,)), ((), ())),
        preferred_element_type=jnp.float32)

    # Numerically-stable exponential.  exp_dtype is bf16 on v6e/v7x (EUP bf16
    # path ~2x, and the MXU operand needs bf16 anyway); f32 on v5e.
    m = jnp.max(scores, axis=-1, keepdims=True)
    e = jnp.exp((scores - m).astype(exp_dtype)).astype(jnp.bfloat16)

    # Unnormalized value matmul.  The wrapper appended a ones-row to the value
    # matrix, so row `vc` of the (VC+1, TQ) result is the softmax denominator
    # (free on the MXU).  out[vct, t] = sum_k v_aug[vct, k] * e[t, k].
    out_aug = jax.lax.dot_general(
        v_ref[0], e,
        dimension_numbers=(((1,), (1,)), ((), ())),
        preferred_element_type=jnp.float32)

    # Deferred normalization on the tiny (VC, TQ) tile; divide goes to EUP.
    inv = pl.reciprocal(out_aug[vc:vc + 1, :], approx=True)
    out_ref[0] = (out_aug[:vc, :] * inv).astype(out_ref.dtype)


def _exp_dtype_for_backend():
    try:
        kind = jax.devices()[0].device_kind.lower()
    except Exception:
        return jnp.float32
    # v6e / v7x EUP has a bf16 transcendental path; v5e and older do not.
    if "v6" in kind or "v7" in kind:
        return jnp.bfloat16
    return jnp.float32


def _pick_tq(hw, interm_budget_bytes=20 << 20):
    """VMEM-aware q-tile size: prefer multiples of 256 (v6e/v7x MXU M-dim),
    fall back to 128 (v5e MXU), else the full row for odd spatial extents."""
    candidates = [t for t in (512, 256, 128) if hw % t == 0]
    if not candidates:
        return hw
    for t in candidates:
        if 3 * t * hw * 4 <= interm_budget_bytes:   # scores/e/temp f32 tiles
            return t
    return candidates[-1]


def feature_flow_attention(feature0, flow, wq, bq, wk, bk, *, tq=None):
    """feature0: (B, C, H, W) NCHW, flow: (B, VC, H, W) NCHW.
    wq, wk: (C, C) nn.Linear weights (out, in); bq, bk: (C,)."""
    b, c, h, w = feature0.shape
    vc = flow.shape[1]
    hw = h * w

    # Channel-major token layout == plain NCHW reshape (no HBM transposes).
    x = feature0.reshape(b, c, hw).astype(jnp.float32)

    wq = jnp.asarray(wq, jnp.float32)
    wk = jnp.asarray(wk, jnp.float32)
    bq = jnp.asarray(bq, jnp.float32)
    bk = jnp.asarray(bk, jnp.float32)

    # Softmax scale folded into the (scaled) query projection only.
    scale = 1.0 / math.sqrt(c)
    wq_s = wq * scale
    bq_s = (bq * scale).reshape(c, 1)

    # Fused key projection k_proj(q_proj(x)) precomputed here (tiny c x c GEMM
    # per batch) and shipped as bf16 channel-major k^T = (Wk Wq) x + (Wk bq+bk).
    wqk = wk @ wq
    bqk = (wk @ bq + bk).reshape(1, c, 1)
    kt = (jnp.einsum("oc,bch->boh", wqk, x) + bqk).astype(jnp.bfloat16)

    # Values in bf16 with an appended ones-row -> softmax denominator comes
    # out of the value matmul for free.
    v = flow.reshape(b, vc, hw).astype(jnp.bfloat16)
    v_aug = jnp.concatenate([v, jnp.ones((b, 1, hw), jnp.bfloat16)], axis=1)

    if tq is None:
        tq = _pick_tq(hw)
    assert hw % tq == 0
    nq = hw // tq

    exp_dtype = _exp_dtype_for_backend()

    # Explicit VMEM budget: the (TQ, HW) f32 scores/e intermediates dominate.
    vmem_bytes = (3 * tq * hw * 4                    # scores / e / temps (f32)
                  + 2 * c * tq * 4                   # x q-tile, double-buffered
                  + 2 * c * hw * 2                   # resident k^T (bf16)
                  + 2 * (vc + 1) * hw * 2            # values + ones row (bf16)
                  + 2 * (c * c + c) * 4              # weights
                  + 2 * vc * tq * 4                  # output tile
                  + (2 << 20))                       # margin
    vmem_bytes = int(min(max(vmem_bytes, 8 << 20), 48 << 20))

    flops = 2 * b * (c * c * hw + hw * hw * c + hw * hw * (vc + 1))
    bytes_accessed = (b * hw * (4 * c + 2 * c + 2 * (vc + 1) + 4 * vc)
                      + 4 * (c * c + c))
    cost = pl.CostEstimate(flops=flops, transcendentals=b * hw * hw,
                           bytes_accessed=bytes_accessed)

    out = pl.pallas_call(
        functools.partial(_ffa_kernel, exp_dtype=exp_dtype),
        out_shape=jax.ShapeDtypeStruct((b, vc, hw), jnp.float32),
        grid_spec=pltpu.PrefetchScalarGridSpec(
            num_scalar_prefetch=0,
            grid=(b, nq),
            in_specs=[
                pl.BlockSpec((1, c, tq), lambda i, j: (i, 0, j)),       # x q-tile
                pl.BlockSpec((1, c, hw), lambda i, j: (i, 0, 0)),       # k^T (bf16)
                pl.BlockSpec((1, vc + 1, hw), lambda i, j: (i, 0, 0)),  # values+1s
                pl.BlockSpec((c, c), lambda i, j: (0, 0)),              # Wq (scaled)
                pl.BlockSpec((c, 1), lambda i, j: (0, 0)),              # bq (scaled)
            ],
            out_specs=pl.BlockSpec((1, vc, tq), lambda i, j: (i, 0, j)),
        ),
        compiler_params=pltpu.CompilerParams(
            dimension_semantics=("parallel", "parallel"),
            vmem_limit_bytes=vmem_bytes),
        cost_estimate=cost,
    )(x, kt, v_aug, wq_s, bq_s)

    # Lane-dense (b, vc, hw) output -> NCHW via a pure reshape (no transpose).
    return out.reshape(b, vc, h, w)


def _xavier_uniform(key, fan_in, fan_out):
    limit = math.sqrt(6.0 / (fan_in + fan_out))
    return jax.random.uniform(key, (fan_out, fan_in), jnp.float32, -limit, limit)


def _reference(feature0, flow, wq, bq, wk, bk):
    b, c, h, w = feature0.shape
    vc = flow.shape[1]
    x = jnp.transpose(feature0.reshape(b, c, h * w), (0, 2, 1))
    v = jnp.transpose(flow.reshape(b, vc, h * w), (0, 2, 1))
    q = x @ wq.T + bq
    k = q @ wk.T + bk
    scores = jnp.einsum("bqc,bkc->bqk", q, k) / math.sqrt(c)
    prob = jax.nn.softmax(scores, axis=-1)
    out = jnp.einsum("bqk,bkv->bqv", prob, v)
    return jnp.transpose(out.reshape(b, h, w, vc), (0, 3, 1, 2))


if __name__ == "__main__":
    key = jax.random.PRNGKey(0)
    k1, k2, k3, k4, k5, k6 = jax.random.split(key, 6)

    B, C, H, W = 2, 32, 16, 16   # small shapes consistent with the module
    FLOW_C = 2

    feature0 = jax.random.normal(k1, (B, C, H, W), jnp.float32)
    flow = jax.random.normal(k2, (B, FLOW_C, H, W), jnp.float32)

    # deterministic parameter init (xavier_uniform weights, small-uniform biases)
    wq = _xavier_uniform(k3, C, C)
    wk = _xavier_uniform(k4, C, C)
    bound = 1.0 / math.sqrt(C)
    bq = jax.random.uniform(k5, (C,), jnp.float32, -bound, bound)
    bk = jax.random.uniform(k6, (C,), jnp.float32, -bound, bound)

    out = feature_flow_attention(feature0, flow, wq, bq, wk, bk)
    out = jax.block_until_ready(out)

    ref = _reference(feature0, flow, wq, bq, wk, bk)
    assert out.shape == (B, FLOW_C, H, W)
    # bf16 operands (q / k^T / e) + approx reciprocal -> relaxed tolerance.
    assert jnp.allclose(out, ref, atol=2e-2, rtol=2e-2), (
        float(jnp.max(jnp.abs(out - ref))))

    # TODO(synk): forward_local_window_attn (F.unfold local-window path) not
    # implemented; only the default global-attention forward is covered.
    print("KERNEL_OK")
</pallas_src>

<mosaic_0001>
module attributes {stable_mosaic.version = 11 : i64} {
  func.func @_ffa_kernel(%arg0: i32, %arg1: i32, %arg2: memref<1x32x256xf32, #tpu.memory_space<vmem>>, %arg3: memref<1x32x256xbf16, #tpu.memory_space<vmem>>, %arg4: memref<1x3x256xbf16, #tpu.memory_space<vmem>>, %arg5: memref<32x32xf32, #tpu.memory_space<vmem>>, %arg6: memref<32x1xf32, #tpu.memory_space<vmem>>, %arg7: memref<1x2x256xf32, #tpu.memory_space<vmem>>) attributes {dimension_semantics = [#tpu.dimension_semantics<parallel>, #tpu.dimension_semantics<parallel>], iteration_bounds = array<i64: 2, 1>, scalar_prefetch = 0 : i64, scratch_operands = 0 : i64, tpu.core_type = #tpu.core_type<tc>, window_params = [{transform_indices = @transform_0, window_bounds = array<i64: 1, 32, 256>}, {transform_indices = @transform_1, window_bounds = array<i64: 1, 32, 256>}, {transform_indices = @transform_2, window_bounds = array<i64: 1, 3, 256>}, {pipeline_mode = #tpu.pipeline_mode<synchronous>, transform_indices = @transform_3, window_bounds = array<i64: 32, 32>}, {pipeline_mode = #tpu.pipeline_mode<synchronous>, transform_indices = @transform_4, window_bounds = array<i64: 32, 1>}, {transform_indices = @transform_5, window_bounds = array<i64: 1, 2, 256>}]} {
    %c0 = arith.constant 0 : index
    %c0_0 = arith.constant 0 : index
    %0 = vector.load %arg5[%c0, %c0_0] : memref<32x32xf32, #tpu.memory_space<vmem>>, vector<32x32xf32>
    %c0_1 = arith.constant 0 : index
    %c0_2 = arith.constant 0 : index
    %c0_3 = arith.constant 0 : index
    %1 = vector.load %arg2[%c0_1, %c0_2, %c0_3] : memref<1x32x256xf32, #tpu.memory_space<vmem>>, vector<1x32x256xf32>
    %2 = vector.shape_cast %1 : vector<1x32x256xf32> to vector<32x256xf32>
    %cst = arith.constant dense<0.000000e+00> : vector<32x256xf32>
    %3 = tpu.matmul %0, %2, %cst {dimension_numbers = #tpu.dot_dimension_numbers<[1], [0], [0], [1], [0, 0, 1, 1], [], []>} : vector<32x32xf32>, vector<32x256xf32>, vector<32x256xf32> -> vector<32x256xf32>
    %c0_4 = arith.constant 0 : index
    %c0_5 = arith.constant 0 : index
    %4 = vector.load %arg6[%c0_4, %c0_5] : memref<32x1xf32, #tpu.memory_space<vmem>>, vector<32x1xf32>
    %5 = vector.broadcast %4 : vector<32x1xf32> to vector<32x256xf32>
    %6 = arith.addf %3, %5 : vector<32x256xf32>
    %7 = arith.truncf %6 : vector<32x256xf32> to vector<32x256xbf16>
    %c0_6 = arith.constant 0 : index
    %c0_7 = arith.constant 0 : index
    %c0_8 = arith.constant 0 : index
    %8 = vector.load %arg3[%c0_6, %c0_7, %c0_8] : memref<1x32x256xbf16, #tpu.memory_space<vmem>>, vector<1x32x256xbf16>
    %9 = vector.shape_cast %8 : vector<1x32x256xbf16> to vector<32x256xbf16>
    %cst_9 = arith.constant dense<0.000000e+00> : vector<256x256xf32>
    %10 = tpu.matmul %7, %9, %cst_9 {dimension_numbers = #tpu.dot_dimension_numbers<[0], [0], [1], [1], [0, 1, 1, 1], [], []>} : vector<32x256xbf16>, vector<32x256xbf16>, vector<256x256xf32> -> vector<256x256xf32>
    %cst_10 = arith.constant dense<0xFF800000> : vector<256xf32>
    %11 = vector.multi_reduction <maximumf>, %10, %cst_10 [1] : vector<256x256xf32> to vector<256xf32>
    %12 = vector.shape_cast %11 : vector<256xf32> to vector<256x1xf32>
    %13 = vector.broadcast %12 : vector<256x1xf32> to vector<256x256xf32>
    %14 = arith.subf %10, %13 : vector<256x256xf32>
    %15 = math.exp %14 : vector<256x256xf32>
    %16 = arith.truncf %15 : vector<256x256xf32> to vector<256x256xbf16>
    %c0_11 = arith.constant 0 : index
    %c0_12 = arith.constant 0 : index
    %c0_13 = arith.constant 0 : index
    %17 = vector.load %arg4[%c0_11, %c0_12, %c0_13] : memref<1x3x256xbf16, #tpu.memory_space<vmem>>, vector<1x3x256xbf16>
    %18 = vector.shape_cast %17 : vector<1x3x256xbf16> to vector<3x256xbf16>
    %cst_14 = arith.constant dense<0.000000e+00> : vector<3x256xf32>
    %19 = tpu.matmul %18, %16, %cst_14 {dimension_numbers = #tpu.dot_dimension_numbers<[1], [1], [0], [0], [0, 0, 1, 0], [], []>} : vector<3x256xbf16>, vector<256x256xbf16>, vector<3x256xf32> -> vector<3x256xf32>
    %20 = vector.extract_strided_slice %19 {offsets = [2, 0], sizes = [1, 256], strides = [1, 1]} : vector<3x256xf32> to vector<1x256xf32>
    %21 = tpu.reciprocal %20 {approx = true} : vector<1x256xf32> -> vector<1x256xf32>
    %22 = vector.extract_strided_slice %19 {offsets = [0, 0], sizes = [2, 256], strides = [1, 1]} : vector<3x256xf32> to vector<2x256xf32>
    %23 = vector.broadcast %21 : vector<1x256xf32> to vector<2x256xf32>
    %24 = arith.mulf %22, %23 : vector<2x256xf32>
    %c0_15 = arith.constant 0 : index
    %c0_16 = arith.constant 0 : index
    %c0_17 = arith.constant 0 : index
    %25 = vector.load %arg7[%c0_15, %c0_16, %c0_17] : memref<1x2x256xf32, #tpu.memory_space<vmem>>, vector<1x2x256xf32>
    %26 = vector.shape_cast %25 : vector<1x2x256xf32> to vector<2x256xf32>
    %27 = vector.shape_cast %24 : vector<2x256xf32> to vector<1x2x256xf32>
    tpu.vector_store %arg7[%c0_15, %c0_16, %c0_17], %27 {strides = array<i32>} : memref<1x2x256xf32, #tpu.memory_space<vmem>>, vector<1x2x256xf32>,
    return
  }
  func.func @transform_0(%arg0: i32, %arg1: i32) -> (i32, i32, i32) {
    %c0_i32 = arith.constant 0 : i32
    %c0_i32_0 = arith.constant 0 : i32
    return %arg0, %c0_i32, %arg1 : i32, i32, i32
  }
  func.func @transform_1(%arg0: i32, %arg1: i32) -> (i32, i32, i32) {
    %c0_i32 = arith.constant 0 : i32
    %c0_i32_0 = arith.constant 0 : i32
    %c0_i32_1 = arith.constant 0 : i32
    return %arg0, %c0_i32, %c0_i32_0 : i32, i32, i32
  }
  func.func @transform_2(%arg0: i32, %arg1: i32) -> (i32, i32, i32) {
    %c0_i32 = arith.constant 0 : i32
    %c0_i32_0 = arith.constant 0 : i32
    %c0_i32_1 = arith.constant 0 : i32
    return %arg0, %c0_i32, %c0_i32_0 : i32, i32, i32
  }
  func.func @transform_3(%arg0: i32, %arg1: i32) -> (i32, i32) {
    %c0_i32 = arith.constant 0 : i32
    %c0_i32_0 = arith.constant 0 : i32
    %c0_i32_1 = arith.constant 0 : i32
    return %c0_i32, %c0_i32_0 : i32, i32
  }
  func.func @transform_4(%arg0: i32, %arg1: i32) -> (i32, i32) {
    %c0_i32 = arith.constant 0 : i32
    %c0_i32_0 = arith.constant 0 : i32
    %c0_i32_1 = arith.constant 0 : i32
    return %c0_i32, %c0_i32_0 : i32, i32
  }
  func.func @transform_5(%arg0: i32, %arg1: i32) -> (i32, i32, i32) {
    %c0_i32 = arith.constant 0 : i32
    %c0_i32_0 = arith.constant 0 : i32
    return %arg0, %c0_i32, %arg1 : i32, i32, i32
  }
}

</mosaic_0001>

<llo_original>
// kernel: tpu_custom_call.1
$region0: #{tpu_custom_call.1}
  #allocation0 [shape = 'u32[]', space=smem, size = 0x4, offset = 0x4, fixed_abs, tag = 'smem constant byte address 0x4 - core index']
  #allocation1 [shape = 'u32[144,128]{1,0:T(1,128)}', space=vmem, size = 0x12000, scoped, tag = 'internal scratch']
  %s0 = inlined_call_operand.hbm [shape: f32[2,32,256], index: 0, kind: input, shape index: {}]
  %s1 = inlined_call_operand.hbm [shape: bf16[2,32,256], index: 1, kind: input, shape index: {}]
  %s2 = inlined_call_operand.vmem [shape: bf16[2,3,256], index: 2, kind: input, shape index: {}]
  %s3 = inlined_call_operand.vmem [shape: f32[32,32], index: 3, kind: input, shape index: {}]
  %s4 = inlined_call_operand.vmem [shape: f32[32,1], index: 4, kind: input, shape index: {}]
  %s5 = inlined_call_operand.hbm [shape: f32[2,2,256], index: 5, kind: output, shape index: {}]
  %s6 = sld [smem:[#allocation0]]
  $region61: #{tpu_custom_call.1} parent=0
    _
  %s8 = ssub.s32 1, %s6
  %s9 = scalar_select 0, %s8, %s6
  $region1: #{tpu_custom_call.1} parent=0
    #allocation2 [shape = 'u8[65536]{0}', space=vmem, size = 0x10000, scoped, tag = 'input window, operand 0']
    #allocation3 [shape = 's32[2]{0}', space=sflag, size = 0x8, scoped, tag = 'scoped memory for tpu_custom_call.1']
    #allocation4 [shape = 's32[2]{0}', space=sflag, size = 0x8, scoped, tag = 'scoped memory for tpu_custom_call.1']
    #allocation5 [shape = 'u8[32768]{0}', space=vmem, size = 0x8000, scoped, tag = 'input window, operand 1']
    #allocation6 [shape = 's32[2]{0}', space=sflag, size = 0x8, scoped, tag = 'scoped memory for tpu_custom_call.1']
    #allocation7 [shape = 'u8[4096]{0}', space=vmem, size = 0x1000, scoped, tag = 'output window, operand 0']
    %10 = vsyncpa [#allocation3], 0
    %s11 = scalar_lea.sflag [#allocation3], 1
    %12 = vsyncpa %s11, 0
    %13 = vsyncpa [#allocation6], 0
    %s14 = scalar_lea.sflag [#allocation6], 1
    %15 = vsyncpa %s14, 0
    %16 = vsyncpa [#allocation4], 0
    %s17 = scalar_lea.sflag [#allocation4], 1
    %18 = vsyncpa %s17, 0
    loop: start=0, step=1, limit=4
    $region2: #{tpu_custom_call.1} parent=1 // loop_pre_header
      _
    $region3: #{tpu_custom_call.1} parent=1 // loop_header
      %s20 = sphi 0, %s24
      %p21 = scmp.ge.s32.totalorder %s20, 4
      %s27 = sphi 0, %s39
      %s28 = sphi 0, %s35
      %s29 = sphi 0, %s27
      %s30 = sphi 0, %s28
      %s31 = sphi 0, %s29
      %s32 = sphi 0, %s30
      %s44 = sphi 0, %s46
      %s47 = sphi 0, %s44
      %s48 = sphi 0, %s47
      %s64 = sphi 0, %s48
      %s70 = sphi 0, %s72
      %s73 = sphi 0, %s70
      %s74 = sphi 0, %s73
      %s90 = sphi 0, %s74
      %s96 = sphi 0, %s98
      %s99 = sphi 0, %s96
      %s100 = sphi 0, %s99
      %s116 = sphi 0, %s100
      %s120 = sphi 0, %s120
      %s122 = sphi 0, %s120
      %s123 = sphi 0, %s122
      %s137 = sphi 0, %s123
      %s141 = sphi 0, %s141
      %s143 = sphi 0, %s141
      %s144 = sphi 0, %s143
      %s158 = sphi 0, %s144
      %s166 = sphi 0, %s168
      %s169 = sphi 0, %s166
      %s170 = sphi 0, %s169
      %s186 = sphi 0, %s170
    $region4: #{tpu_custom_call.1} parent=1 // loop_header_branch
      %23 = sbr.rel (%p21) target = $region8
    $region5: #{tpu_custom_call.1} parent=1 // loop_body
      %s25 = ssub.s32 %s20, 1
      %s26 = ssub.s32 %s20, 2
      %s33 = sadd.s32 1, %s28
      %p34 = scmp.ge.s32.totalorder %s33, 1
      %s35 = scalar_select %p34, 0, %s33
      %s36 = sadd.s32 1, %s27
      %s37 = scalar_select %p34, %s36, %s27
      %p38 = scmp.ge.s32.totalorder %s37, 2
      %s39 = scalar_select %p38, 0, %s37
      %s40 = ssub.s32 %s27, %s39
      %s41 = ssub.s32 %s28, %s35
      %s42 = sor.u32 %s40, %s41
      %p43 = scmp.eq.s32.totalorder %s42, 0
      %s45 = sadd.s32 %s44, 1
      %s46 = scalar_select %p43, %s44, %s45
      %p49 = pneg %p43
      %p50 = scmp.eq.s32.totalorder %s20, 1
      %p51 = por %p49, %p50
      %p52 = scmp.ne.s32.totalorder %s44, %s47
      %p53 = scmp.eq.s32.totalorder %s20, 0
      %p54 = por %p52, %p53
      %p55 = scmp.ne.s32.totalorder %s44, %s47
      %p56 = scmp.eq.s32.totalorder %s25, 1
      %p57 = por %p55, %p56
      %p58 = scmp.ne.s32.totalorder %s47, %s48
      %p59 = scmp.eq.s32.totalorder %s25, 0
      %p60 = por %p58, %p59
      %p61 = scmp.ne.s32.totalorder %s47, %s48
      %p62 = scmp.eq.s32.totalorder %s26, 1
      %p63 = por %p61, %p62
      %p65 = scmp.ne.s32.totalorder %s48, %s64
      %p66 = scmp.eq.s32.totalorder %s26, 0
      %p67 = por %p65, %p66
      %s68 = ssub.s32 %s27, %s39
      %p69 = scmp.eq.s32.totalorder %s68, 0
      %s71 = sadd.s32 %s70, 1
      %s72 = scalar_select %p69, %s70, %s71
      %p75 = pneg %p69
      %p76 = scmp.eq.s32.totalorder %s20, 1
      %p77 = por %p75, %p76
      %p78 = scmp.ne.s32.totalorder %s70, %s73
      %p79 = scmp.eq.s32.totalorder %s20, 0
      %p80 = por %p78, %p79
      %p81 = scmp.ne.s32.totalorder %s70, %s73
      %p82 = scmp.eq.s32.totalorder %s25, 1
      %p83 = por %p81, %p82
      %p84 = scmp.ne.s32.totalorder %s73, %s74
      %p85 = scmp.eq.s32.totalorder %s25, 0
      %p86 = por %p84, %p85
      %p87 = scmp.ne.s32.totalorder %s73, %s74
      %p88 = scmp.eq.s32.totalorder %s26, 1
      %p89 = por %p87, %p88
      %p91 = scmp.ne.s32.totalorder %s74, %s90
      %p92 = scmp.eq.s32.totalorder %s26, 0
      %p93 = por %p91, %p92
      %s94 = ssub.s32 %s27, %s39
      %p95 = scmp.eq.s32.totalorder %s94, 0
      %s97 = sadd.s32 %s96, 1
      %s98 = scalar_select %p95, %s96, %s97
      %p101 = pneg %p95
      %p102 = scmp.eq.s32.totalorder %s20, 1
      %p103 = por %p101, %p102
      %p104 = scmp.ne.s32.totalorder %s96, %s99
      %p105 = scmp.eq.s32.totalorder %s20, 0
      %p106 = por %p104, %p105
      %p107 = scmp.ne.s32.totalorder %s96, %s99
      %p108 = scmp.eq.s32.totalorder %s25, 1
      %p109 = por %p107, %p108
      %p110 = scmp.ne.s32.totalorder %s99, %s100
      %p111 = scmp.eq.s32.totalorder %s25, 0
      %p112 = por %p110, %p111
      %p113 = scmp.ne.s32.totalorder %s99, %s100
      %p114 = scmp.eq.s32.totalorder %s26, 1
      %p115 = por %p113, %p114
      %p117 = scmp.ne.s32.totalorder %s100, %s116
      %p118 = scmp.eq.s32.totalorder %s26, 0
      %p119 = por %p117, %p118
      %s121 = sadd.s32 %s120, 1
      %p124 = scmp.eq.s32.totalorder %s20, 1
      %p125 = scmp.ne.s32.totalorder %s120, %s122
      %p126 = scmp.eq.s32.totalorder %s20, 0
      %p127 = por %p125, %p126
      %p128 = scmp.ne.s32.totalorder %s120, %s122
      %p129 = scmp.eq.s32.totalorder %s25, 1
      %p130 = por %p128, %p129
      %p131 = scmp.ne.s32.totalorder %s122, %s123
      %p132 = scmp.eq.s32.totalorder %s25, 0
      %p133 = por %p131, %p132
      %p134 = scmp.ne.s32.totalorder %s122, %s123
      %p135 = scmp.eq.s32.totalorder %s26, 1
      %p136 = por %p134, %p135
      %p138 = scmp.ne.s32.totalorder %s123, %s137
      %p139 = scmp.eq.s32.totalorder %s26, 0
      %p140 = por %p138, %p139
      %s142 = sadd.s32 %s141, 1
      %p145 = scmp.eq.s32.totalorder %s20, 1
      %p146 = scmp.ne.s32.totalorder %s141, %s143
      %p147 = scmp.eq.s32.totalorder %s20, 0
      %p148 = por %p146, %p147
      %p149 = scmp.ne.s32.totalorder %s141, %s143
      %p150 = scmp.eq.s32.totalorder %s25, 1
      %p151 = por %p149, %p150
      %p152 = scmp.ne.s32.totalorder %s143, %s144
      %p153 = scmp.eq.s32.totalorder %s25, 0
      %p154 = por %p152, %p153
      %p155 = scmp.ne.s32.totalorder %s143, %s144
      %p156 = scmp.eq.s32.totalorder %s26, 1
      %p157 = por %p155, %p156
      %p159 = scmp.ne.s32.totalorder %s144, %s158
      %p160 = scmp.eq.s32.totalorder %s26, 0
      %p161 = por %p159, %p160
      %s162 = ssub.s32 %s27, %s39
      %s163 = ssub.s32 %s28, %s35
      %s164 = sor.u32 %s162, %s163
      %p165 = scmp.eq.s32.totalorder %s164, 0
      %s167 = sadd.s32 %s166, 1
      %s168 = scalar_select %p165, %s166, %s167
      %p171 = pneg %p165
      %p172 = scmp.eq.s32.totalorder %s20, 1
      %p173 = por %p171, %p172
      %p174 = scmp.ne.s32.totalorder %s166, %s169
      %p175 = scmp.eq.s32.totalorder %s20, 0
      %p176 = por %p174, %p175
      %p177 = scmp.ne.s32.totalorder %s166, %s169
      %p178 = scmp.eq.s32.totalorder %s25, 1
      %p179 = por %p177, %p178
      %p180 = scmp.ne.s32.totalorder %s169, %s170
      %p181 = scmp.eq.s32.totalorder %s25, 0
      %p182 = por %p180, %p181
      %p183 = scmp.ne.s32.totalorder %s169, %s170
      %p184 = scmp.eq.s32.totalorder %s26, 1
      %p185 = por %p183, %p184
      %p187 = scmp.ne.s32.totalorder %s170, %s186
      %p188 = scmp.eq.s32.totalorder %s26, 0
      %p189 = por %p187, %p188
      %p190 = scmp.le.s32.totalorder 1, %s20
      %p191 = scmp.lt.s32.totalorder %s20, 3
      %p192 = pnand %p190, %p191
      %p193 = pneg %p192
      // Predicated region
      $region9: #{tpu_custom_call.1} parent=5 // pred_check
        _
      $region10: #{tpu_custom_call.1} parent=5 // pred_check_branch
        %195 = sbr.rel (%p192) target = $region12
      $region11: #{tpu_custom_call.1} parent=5 // pred_region
        %s196 = ssub.s32 %s20, 1
        // Predicated region
        $region13: #{tpu_custom_call.1} parent=11 // pred_check
          %p197 = pneg %p133
        $region14: #{tpu_custom_call.1} parent=11 // pred_check_branch
          %199 = sbr.rel (%p197) target = $region16
        $region15: #{tpu_custom_call.1} parent=11 // pred_region
          _
        $region16: #{tpu_custom_call.1} parent=11 // pred_fallthru
          _
        // Predicated region
        $region17: #{tpu_custom_call.1} parent=11 // pred_check
          %p200 = pneg %p154
        $region18: #{tpu_custom_call.1} parent=11 // pred_check_branch
          %202 = sbr.rel (%p200) target = $region20
        $region19: #{tpu_custom_call.1} parent=11 // pred_region
          _
        $region20: #{tpu_custom_call.1} parent=11 // pred_fallthru
          _
      $region12: #{tpu_custom_call.1} parent=5 // pred_fallthru
        _
      %p203 = scmp.lt.s32.totalorder %s20, 2
      // Predicated region
      $region21: #{tpu_custom_call.1} parent=5 // pred_check
        %p204 = pneg %p203
      $region22: #{tpu_custom_call.1} parent=5 // pred_check_branch
        %206 = sbr.rel (%p204) target = $region24
      $region23: #{tpu_custom_call.1} parent=5 // pred_region
        // Predicated region
        $region25: #{tpu_custom_call.1} parent=23 // pred_check
          %p207 = pneg %p54
        $region26: #{tpu_custom_call.1} parent=23 // pred_check_branch
          %209 = sbr.rel (%p207) target = $region28
        $region27: #{tpu_custom_call.1} parent=23 // pred_region
          %s210 = sand.u32 %s44, 1
          %s211 = scalar_lea.sflag [#allocation3], %s210
          %s212 = sand.u32 %s44, 1
          %s213 = smul.addr %s212, 64
          %s214 = scalar_lea.vmem [#allocation2], %s213
          %s215 = smul.u32 2, %s28
          %s217 = ssub.s32 1024, 1024
          %218 = vsyncadd %s211, %s217
          %s219 = smul.addr %s27, 8
          %s220 = sadd.s32 %s215, %s219
          %s221 = smul.addr %s220, 128
          %s222 = scalar_lea.hbm %s0, %s221
          %s223 = sshll.u32 %s214, 4
          %s224 = int_to_ptr.vmem [resolvable:$true] %s223
          %229 = dma.hbm_to_vmem [thread:$0]  %s222, 1024, %s224, %s211, 256, 256, 16
        $region28: #{tpu_custom_call.1} parent=23 // pred_fallthru
          _
        // Predicated region
        $region29: #{tpu_custom_call.1} parent=23 // pred_check
          %p230 = pneg %p80
        $region30: #{tpu_custom_call.1} parent=23 // pred_check_branch
          %232 = sbr.rel (%p230) target = $region32
        $region31: #{tpu_custom_call.1} parent=23 // pred_region
          %s233 = sand.u32 %s70, 1
          %s234 = scalar_lea.sflag [#allocation6], %s233
          %s235 = sand.u32 %s70, 1
          %s236 = smul.addr %s235, 32
          %s237 = scalar_lea.vmem [#allocation5], %s236
          %s239 = ssub.s32 512, 512
          %240 = vsyncadd %s234, %s239
          %s241 = smul.addr %s27, 8
          %s242 = smul.addr %s241, 64
          %s243 = scalar_lea.hbm %s1, %s242
          %s244 = sshll.u32 %s237, 4
          %s245 = int_to_ptr.vmem [resolvable:$true] %s244
          %250 = dma.hbm_to_vmem [thread:$0]  %s243, 512, %s245, %s234, 128, 128, 8
        $region32: #{tpu_custom_call.1} parent=23 // pred_fallthru
          _
        // Predicated region
        $region33: #{tpu_custom_call.1} parent=23 // pred_check
          %p251 = pneg %p106
        $region34: #{tpu_custom_call.1} parent=23 // pred_check_branch
          %253 = sbr.rel (%p251) target = $region36
        $region35: #{tpu_custom_call.1} parent=23 // pred_region
          %p254 = scmp.lt.s32.totalorder %s27, 1
          %s255 = scalar_select %p254, %s27, 1
          %s256 = smul.addr %s255, 2
          %s257 = smul.addr %s256, 2
          %s258 = scalar_lea.vmem %s2, %s257
        $region36: #{tpu_custom_call.1} parent=23 // pred_fallthru
          _
      $region24: #{tpu_custom_call.1} parent=5 // pred_fallthru
        _
      %p259 = scmp.le.s32.totalorder 1, %s20
      %p260 = scmp.lt.s32.totalorder %s20, 3
      %p261 = pnand %p259, %p260
      %p262 = pneg %p261
      // Predicated region
      $region37: #{tpu_custom_call.1} parent=5 // pred_check
        _
      $region38: #{tpu_custom_call.1} parent=5 // pred_check_branch
        %264 = sbr.rel (%p261) target = $region40
      $region39: #{tpu_custom_call.1} parent=5 // pred_region
        %s265 = ssub.s32 %s20, 1
        %s266 = sand.u32 %s47, 1
        %s267 = scalar_lea.sflag [#allocation3], %s266
        %s268 = sand.u32 %s47, 1
        %s269 = smul.addr %s268, 64
        %s270 = scalar_lea.vmem [#allocation2], %s269
        // Predicated region
        $region41: #{tpu_custom_call.1} parent=39 // pred_check
          %p271 = pneg %p60
        $region42: #{tpu_custom_call.1} parent=39 // pred_check_branch
          %273 = sbr.rel (%p271) target = $region44
        $region43: #{tpu_custom_call.1} parent=39 // pred_region
          %274 = dma.done %s267, 1024
        $region44: #{tpu_custom_call.1} parent=39 // pred_fallthru
          _
        %s275 = sand.u32 %s73, 1
        %s276 = scalar_lea.sflag [#allocation6], %s275
        %s277 = sand.u32 %s73, 1
        %s278 = smul.addr %s277, 32
        %s279 = scalar_lea.vmem [#allocation5], %s278
        // Predicated region
        $region45: #{tpu_custom_call.1} parent=39 // pred_check
          %p280 = pneg %p86
        $region46: #{tpu_custom_call.1} parent=39 // pred_check_branch
          %282 = sbr.rel (%p280) target = $region48
        $region47: #{tpu_custom_call.1} parent=39 // pred_region
          %283 = dma.done %s276, 512
        $region48: #{tpu_custom_call.1} parent=39 // pred_fallthru
          _
        %s284 = sand.u32 %s47, 1
        %s285 = scalar_lea.sflag [#allocation3], %s284
        %s286 = sand.u32 %s47, 1
        %s287 = smul.addr %s286, 64
        %s288 = scalar_lea.vmem [#allocation2], %s287
        %p289 = pneg %p60
        %p290 = pneg %p57
        %s291 = sand.u32 %s73, 1
        %s292 = scalar_lea.sflag [#allocation6], %s291
        %s293 = sand.u32 %s73, 1
        %s294 = smul.addr %s293, 32
        %s295 = scalar_lea.vmem [#allocation5], %s294
        %p296 = pneg %p86
        %p297 = pneg %p83
        %p298 = scmp.lt.s32.totalorder %s29, 1
        %s299 = scalar_select %p298, %s29, 1
        %s300 = smul.addr %s299, 2
        %s301 = smul.addr %s300, 2
        %s302 = scalar_lea.vmem %s2, %s301
        %p303 = pneg %p112
        %p304 = pneg %p109
        %p305 = pneg %p133
        %p306 = pneg %p130
        %p307 = pneg %p154
        %p308 = pneg %p151
        %p309 = pneg %p182
        %p310 = pneg %p179
        %s311 = sand.u32 %s169, 1
        %s312 = scalar_lea.sflag [#allocation4], %s311
        %s313 = sand.u32 %s169, 1
        %s314 = smul.addr %s313, 4
        %s315 = scalar_lea.vmem [#allocation7], %s314
        %s316 = smul.u32 2, %s30
        %p317 = scmp.lt.s32.totalorder %s29, 1
        %s318 = scalar_select %p317, %s29, 1
        %s319 = smul.addr %s318, 2
        %s320 = smul.addr %s319, 2
        %s321 = scalar_lea.vmem %s2, %s320
        %s322 = smul.u32 2, %s30
        %v324 = vld [vmem:[%s3] sm:$0xff]
        %v325 = vld [vmem:[%s3 + $0x8] sm:$0xff]
        %v326 = vld [vmem:[%s3 + $0x10] sm:$0xff]
        %v327 = vld [vmem:[%s3 + $0x18] sm:$0xff]
        %v328 = vld [vmem:[%s270] sm:$0xff]
        %v329 = vld [vmem:[%s270 + $0x8] sm:$0xff]
        %v330 = vld [vmem:[%s270 + $0x10] sm:$0xff]
        %v331 = vld [vmem:[%s270 + $0x18] sm:$0xff]
        %v332 = vld [vmem:[%s270 + $0x20] sm:$0xff]
        %v333 = vld [vmem:[%s270 + $0x28] sm:$0xff]
        %v334 = vld [vmem:[%s270 + $0x30] sm:$0xff]
        %v335 = vld [vmem:[%s270 + $0x38] sm:$0xff]
        %v336 = vld [vmem:[%s4] sm:$0xff]
        %v337 = vld [vmem:[%s4 + $0x8] sm:$0xff]
        %v338 = vld [vmem:[%s4 + $0x10] sm:$0xff]
        %v339 = vld [vmem:[%s4 + $0x18] sm:$0xff]
        %341 = vset.pattern.permute.xlu0 0
        %342 = vperm.xlu0 %341, %v336
        %v343 = vpop.permute.xlu0 %342
        %346 = vset.pattern.permute.xlu0 0
        %347 = vperm.xlu0 %346, %v337
        %v348 = vpop.permute.xlu0 %347
        %351 = vset.pattern.permute.xlu0 0
        %352 = vperm.xlu0 %351, %v338
        %v353 = vpop.permute.xlu0 %352
        %356 = vset.pattern.permute.xlu0 0
        %357 = vperm.xlu0 %356, %v339
        %v358 = vpop.permute.xlu0 %357
        %vm360 = vcmask 261120
        %v362 = vsel %vm360, %v324, 0
        %v365 = vsel %vm360, %v325, 0
        %v368 = vsel %vm360, %v326, 0
        %v371 = vsel %vm360, %v327, 0
        %373 = vmatprep.subr.mxu0 %v329
        %374 = vmatpush1.msra.mxu0 %v328
        %375 = vmatprep.subr.mxu0 %v331
        %376 = vmatpush1.msra.mxu0 %v330
        %377 = vmatprep.subr.mxu0 %v333
        %378 = vmatpush1.msra.mxu0 %v332
        %379 = vmatprep.subr.mxu0 %v335
        %380 = vmatpush1.msra.mxu0 %v334
        %381 = vmatprep.subr.mxu0 0.0
        %382 = vmatpush1.msra.mxu0 0.0
        %383 = vmatprep.subr.mxu0 0.0
        %384 = vmatpush1.msra.mxu0 0.0
        %385 = vmatprep.subr.mxu0 0.0
        %386 = vmatpush1.msra.mxu0 0.0
        %387 = vmatprep.subr.mxu0 0.0
        %388 = vmatpush1.msra.mxu0 0.0
        %389 = vmatprep.subr.mxu0 0.0
        %390 = vmatpush1.msra.mxu0 0.0
        %391 = vmatprep.subr.mxu0 0.0
        %392 = vmatpush1.msra.mxu0 0.0
        %393 = vmatprep.subr.mxu0 0.0
        %394 = vmatpush1.msra.mxu0 0.0
        %395 = vmatprep.subr.mxu0 0.0
        %396 = vmatpush1.msra.mxu0 0.0
        %397 = vmatprep.subr.mxu0 0.0
        %398 = vmatpush1.msra.mxu0 0.0
        %399 = vmatprep.subr.mxu0 0.0
        %400 = vmatpush1.msra.mxu0 0.0
        %401 = vmatprep.subr.mxu0 0.0
        %402 = vmatpush1.msra.mxu0 0.0
        %403 = vmatprep.subr.mxu0 0.0
        %404 = vmatpush1.msra.mxu0 0.0
        %405 = vmatprep.subr.mxu0 0.0
        %406 = vmatpush1.msra.mxu0 0.0
        %407 = vmatprep.subr.mxu0 0.0
        %408 = vmatpush1.msra.mxu0 0.0
        %409 = vmatprep.subr.mxu0 0.0
        %410 = vmatpush1.msra.mxu0 0.0
        %411 = vmatprep.subr.mxu0 0.0
        %412 = vmatpush1.msra.mxu0 0.0
        %413 = vmatprep.subr.mxu0 0.0
        %414 = vmatpush1.msra.mxu0 0.0
        %415 = vmatprep.subr.mxu0 0.0
        %416 = vmatpush1.msra.mxu0 0.0
        %417 = vmatprep.subr.mxu0 0.0
        %418 = vmatpush1.msra.mxu0 0.0
        %419 = vmatprep.subr.mxu0 0.0
        %420 = vmatpush1.msra.mxu0 0.0
        %421 = vmatprep.subr.mxu0 0.0
        %422 = vmatpush1.msra.mxu0 0.0
        %423 = vmatprep.subr.mxu0 0.0
        %424 = vmatpush1.msra.mxu0 0.0
        %425 = vmatprep.subr.mxu0 0.0
        %426 = vmatpush1.msra.mxu0 0.0
        %427 = vmatprep.subr.mxu0 0.0
        %428 = vmatpush1.msra.mxu0 0.0
        %429 = vmatprep.subr.mxu0 0.0
        %430 = vmatpush1.msra.mxu0 0.0
        %431 = vmatprep.subr.mxu0 0.0
        %432 = vmatpush1.msra.mxu0 0.0
        %433 = vmatprep.subr.mxu0 0.0
        %434 = vmatpush1.msra.mxu0 0.0
        %435 = vmatprep.subr.mxu0 0.0
        %436 = vmatpush1.msra.mxu0 0.0
        %437 = vmatprep.mubr.f32.mxu0 0.0
        %438 = vmatmul.mubr.f32.gmra.mrb[0].mxu0 %v362
        %v439 = vpop.f32.mrb[0].mxu0
        %v440 = vadd.f32 %v343, %v439
        %v441 = vpop.f32.mrb[0].mxu0
        %v442 = vadd.f32 %v343, %v441
        %443 = vmatprep.mubr.f32.mxu0 0.0
        %444 = vmatmul.mubr.f32.gmra.mrb[0].mxu0 %v365
        %v445 = vpop.f32.mrb[0].mxu0
        %v446 = vadd.f32 %v348, %v445
        %v447 = vpop.f32.mrb[0].mxu0
        %v448 = vadd.f32 %v348, %v447
        %449 = vmatprep.mubr.f32.mxu0 0.0
        %450 = vmatmul.mubr.f32.gmra.mrb[0].mxu0 %v368
        %v451 = vpop.f32.mrb[0].mxu0
        %v452 = vadd.f32 %v353, %v451
        %v453 = vpop.f32.mrb[0].mxu0
        %v454 = vadd.f32 %v353, %v453
        %455 = vmatprep.mubr.f32.mxu0 0.0
        %456 = vmatmul.mubr.f32.gmra.mrb[0].mxu0 %v371
        %v457 = vpop.f32.mrb[0].mxu0
        %v458 = vadd.f32 %v358, %v457
        %v459 = vpop.f32.mrb[0].mxu0
        %v460 = vadd.f32 %v358, %v459
        %461 = vdwg.mxu0
        %v462 = vpack.c.bf16 %v446, %v440
        %v463 = vpack.c.bf16 %v448, %v442
        %v464 = vpack.c.bf16 %v458, %v452
        %v465 = vpack.c.bf16 %v460, %v454
        %v466 = vld [vmem:[%s279] sm:$0xff]
        %v467 = vld [vmem:[%s279 + $0x8] sm:$0xff]
        %v468 = vld [vmem:[%s279 + $0x10] sm:$0xff]
        %v469 = vld [vmem:[%s279 + $0x18] sm:$0xff]
        %470 = vxpose.xlu0.c.b16.start [1/8] %v462, 128
        %471 = vxpose.xlu0.c.b16.cont [2/8] %v464, 128
        %472 = vxpose.xlu0.c.b16.cont [3/8] 0, 128
        %473 = vxpose.xlu0.c.b16.cont [4/8] 0, 128
        %474 = vxpose.xlu0.c.b16.cont [5/8] 0, 128
        %475 = vxpose.xlu0.c.b16.cont [6/8] 0, 128
        %476 = vxpose.xlu0.c.b16.cont [7/8] 0, 128
        %477 = vxpose.xlu0.c.b16.end [8/8] 0, 128
        %v478 = vpop.trf.xlu0
        %v479 = vpop.trf.xlu0
        %v480 = vpop.trf.xlu0
        %v481 = vpop.trf.xlu0
        %v482 = vpop.trf.xlu0
        %v483 = vpop.trf.xlu0
        %v484 = vpop.trf.xlu0
        %v485 = vpop.trf.xlu0
        %486 = vxpose.xlu0.c.b16.start [1/8] %v463, 128
        %487 = vxpose.xlu0.c.b16.cont [2/8] %v465, 128
        %488 = vxpose.xlu0.c.b16.cont [3/8] 0, 128
        %489 = vxpose.xlu0.c.b16.cont [4/8] 0, 128
        %490 = vxpose.xlu0.c.b16.cont [5/8] 0, 128
        %491 = vxpose.xlu0.c.b16.cont [6/8] 0, 128
        %492 = vxpose.xlu0.c.b16.cont [7/8] 0, 128
        %493 = vxpose.xlu0.c.b16.end [8/8] 0, 128
        %v494 = vpop.trf.xlu0
        %v495 = vpop.trf.xlu0
        %v496 = vpop.trf.xlu0
        %v497 = vpop.trf.xlu0
        %v498 = vpop.trf.xlu0
        %v499 = vpop.trf.xlu0
        %v500 = vpop.trf.xlu0
        %v501 = vpop.trf.xlu0
        %v506 = vunpack.c.l.b16 %v466
        %v507 = vunpack.c.h.b16 %v466
        %v508 = vunpack.c.l.b16 %v467
        %v509 = vunpack.c.h.b16 %v467
        %v510 = vunpack.c.l.b16 %v468
        %v511 = vunpack.c.h.b16 %v468
        %v512 = vunpack.c.l.b16 %v469
        %v513 = vunpack.c.h.b16 %v469
        %v514 = vpack.c.b16 %v508, %v506
        %v515 = vpack.c.b16 %v509, %v507
        %v516 = vpack.c.b16 %v512, %v510
        %v517 = vpack.c.b16 %v513, %v511
        %v523 = vsel %vm360, %v478, 0
        %v526 = vsel %vm360, %v479, 0
        %v529 = vsel %vm360, %v480, 0
        %v532 = vsel %vm360, %v481, 0
        %v535 = vsel %vm360, %v482, 0
        %v538 = vsel %vm360, %v483, 0
        %v541 = vsel %vm360, %v484, 0
        %v544 = vsel %vm360, %v485, 0
        %v547 = vsel %vm360, %v494, 0
        %v550 = vsel %vm360, %v495, 0
        %v553 = vsel %vm360, %v496, 0
        %v556 = vsel %vm360, %v497, 0
        %v559 = vsel %vm360, %v498, 0
        %v562 = vsel %vm360, %v499, 0
        %v565 = vsel %vm360, %v500, 0
        %v568 = vsel %vm360, %v501, 0
        %570 = vmatprep.subr.bf16.mxu0 %v515
        %571 = vmatpush1.bf16.msra.mxu0 %v514
        %572 = vmatprep.subr.bf16.mxu0 %v517
        %573 = vmatpush1.bf16.msra.mxu0 %v516
        %574 = vmatprep.subr.bf16.mxu0 0
        %575 = vmatpush1.bf16.msra.mxu0 0
        %576 = vmatprep.subr.bf16.mxu0 0
        %577 = vmatpush1.bf16.msra.mxu0 0
        %578 = vmatprep.subr.bf16.mxu0 0
        %579 = vmatpush1.bf16.msra.mxu0 0
        %580 = vmatprep.subr.bf16.mxu0 0
        %581 = vmatpush1.bf16.msra.mxu0 0
        %582 = vmatprep.subr.bf16.mxu0 0
        %583 = vmatpush1.bf16.msra.mxu0 0
        %584 = vmatprep.subr.bf16.mxu0 0
        %585 = vmatpush1.bf16.msra.mxu0 0
        %586 = vmatprep.subr.bf16.mxu0 0
        %587 = vmatpush1.bf16.msra.mxu0 0
        %588 = vmatprep.subr.bf16.mxu0 0
        %589 = vmatpush1.bf16.msra.mxu0 0
        %590 = vmatprep.subr.bf16.mxu0 0
        %591 = vmatpush1.bf16.msra.mxu0 0
        %592 = vmatprep.subr.bf16.mxu0 0
        %593 = vmatpush1.bf16.msra.mxu0 0
        %594 = vmatprep.subr.bf16.mxu0 0
        %595 = vmatpush1.bf16.msra.mxu0 0
        %596 = vmatprep.subr.bf16.mxu0 0
        %597 = vmatpush1.bf16.msra.mxu0 0
        %598 = vmatprep.subr.bf16.mxu0 0
        %599 = vmatpush1.bf16.msra.mxu0 0
        %600 = vmatprep.subr.bf16.mxu0 0
        %601 = vmatpush1.bf16.msra.mxu0 0
        %602 = vmatprep.mubr.bf16.mxu0 0
        %603 = vmatmul.mubr.bf16.gmra.mrb[0].mxu0 %v523
        %v604 = vpop.f32.mrb[0].mxu0
        %v605 = vadd.f32 0.0, %v604
        %v606 = vpop.f32.mrb[0].mxu0
        %v607 = vadd.f32 0.0, %v606
        %v608 = vpop.f32.mrb[0].mxu0
        %v609 = vadd.f32 0.0, %v608
        %v610 = vpop.f32.mrb[0].mxu0
        %v611 = vadd.f32 0.0, %v610
        %612 = vmatprep.mubr.bf16.mxu0 0
        %613 = vmatmul.mubr.bf16.gmra.mrb[0].mxu0 %v526
        %v614 = vpop.f32.mrb[0].mxu0
        %v615 = vadd.f32 0.0, %v614
        %v616 = vpop.f32.mrb[0].mxu0
        %v617 = vadd.f32 0.0, %v616
        %v618 = vpop.f32.mrb[0].mxu0
        %v619 = vadd.f32 0.0, %v618
        %v620 = vpop.f32.mrb[0].mxu0
        %v621 = vadd.f32 0.0, %v620
        %622 = vmatprep.mubr.bf16.mxu0 0
        %623 = vmatmul.mubr.bf16.gmra.mrb[0].mxu0 %v529
        %v624 = vpop.f32.mrb[0].mxu0
        %v625 = vadd.f32 0.0, %v624
        %v626 = vpop.f32.mrb[0].mxu0
        %v627 = vadd.f32 0.0, %v626
        %v628 = vpop.f32.mrb[0].mxu0
        %v629 = vadd.f32 0.0, %v628
        %v630 = vpop.f32.mrb[0].mxu0
        %v631 = vadd.f32 0.0, %v630
        %632 = vmatprep.mubr.bf16.mxu0 0
        %633 = vmatmul.mubr.bf16.gmra.mrb[0].mxu0 %v532
        %v634 = vpop.f32.mrb[0].mxu0
        %v635 = vadd.f32 0.0, %v634
        %v636 = vpop.f32.mrb[0].mxu0
        %v637 = vadd.f32 0.0, %v636
        %v638 = vpop.f32.mrb[0].mxu0
        %v639 = vadd.f32 0.0, %v638
        %v640 = vpop.f32.mrb[0].mxu0
        %v641 = vadd.f32 0.0, %v640
        %642 = vmatprep.mubr.bf16.mxu0 0
        %643 = vmatmul.mubr.bf16.gmra.mrb[0].mxu0 %v535
        %v644 = vpop.f32.mrb[0].mxu0
        %v645 = vadd.f32 0.0, %v644
        %v646 = vpop.f32.mrb[0].mxu0
        %v647 = vadd.f32 0.0, %v646
        %v648 = vpop.f32.mrb[0].mxu0
        %v649 = vadd.f32 0.0, %v648
        %v650 = vpop.f32.mrb[0].mxu0
        %v651 = vadd.f32 0.0, %v650
        %652 = vmatprep.mubr.bf16.mxu0 0
        %653 = vmatmul.mubr.bf16.gmra.mrb[0].mxu0 %v538
        %v654 = vpop.f32.mrb[0].mxu0
        %v655 = vadd.f32 0.0, %v654
        %v656 = vpop.f32.mrb[0].mxu0
        %v657 = vadd.f32 0.0, %v656
        %v658 = vpop.f32.mrb[0].mxu0
        %v659 = vadd.f32 0.0, %v658
        %v660 = vpop.f32.mrb[0].mxu0
        %v661 = vadd.f32 0.0, %v660
        %662 = vmatprep.mubr.bf16.mxu0 0
        %663 = vmatmul.mubr.bf16.gmra.mrb[0].mxu0 %v541
        %v664 = vpop.f32.mrb[0].mxu0
        %v665 = vadd.f32 0.0, %v664
        %v666 = vpop.f32.mrb[0].mxu0
        %v667 = vadd.f32 0.0, %v666
        %v668 = vpop.f32.mrb[0].mxu0
        %v669 = vadd.f32 0.0, %v668
        %v670 = vpop.f32.mrb[0].mxu0
        %v671 = vadd.f32 0.0, %v670
        %672 = vmatprep.mubr.bf16.mxu0 0
        %673 = vmatmul.mubr.bf16.gmra.mrb[0].mxu0 %v544
        %v674 = vpop.f32.mrb[0].mxu0
        %v675 = vadd.f32 0.0, %v674
        %v676 = vpop.f32.mrb[0].mxu0
        %v677 = vadd.f32 0.0, %v676
        %v678 = vpop.f32.mrb[0].mxu0
        %v679 = vadd.f32 0.0, %v678
        %v680 = vpop.f32.mrb[0].mxu0
        %v681 = vadd.f32 0.0, %v680
        %682 = vmatprep.mubr.bf16.mxu0 0
        %683 = vmatmul.mubr.bf16.gmra.mrb[0].mxu0 %v547
        %v684 = vpop.f32.mrb[0].mxu0
        %v685 = vadd.f32 0.0, %v684
        %v686 = vpop.f32.mrb[0].mxu0
        %v687 = vadd.f32 0.0, %v686
        %v688 = vpop.f32.mrb[0].mxu0
        %v689 = vadd.f32 0.0, %v688
        %v690 = vpop.f32.mrb[0].mxu0
        %v691 = vadd.f32 0.0, %v690
        %692 = vmatprep.mubr.bf16.mxu0 0
        %693 = vmatmul.mubr.bf16.gmra.mrb[0].mxu0 %v550
        %v694 = vpop.f32.mrb[0].mxu0
        %v695 = vadd.f32 0.0, %v694
        %v696 = vpop.f32.mrb[0].mxu0
        %v697 = vadd.f32 0.0, %v696
        %v698 = vpop.f32.mrb[0].mxu0
        %v699 = vadd.f32 0.0, %v698
        %v700 = vpop.f32.mrb[0].mxu0
        %v701 = vadd.f32 0.0, %v700
        %702 = vmatprep.mubr.bf16.mxu0 0
        %703 = vmatmul.mubr.bf16.gmra.mrb[0].mxu0 %v553
        %v704 = vpop.f32.mrb[0].mxu0
        %v705 = vadd.f32 0.0, %v704
        %v706 = vpop.f32.mrb[0].mxu0
        %v707 = vadd.f32 0.0, %v706
        %v708 = vpop.f32.mrb[0].mxu0
        %v709 = vadd.f32 0.0, %v708
        %v710 = vpop.f32.mrb[0].mxu0
        %v711 = vadd.f32 0.0, %v710
        %712 = vmatprep.mubr.bf16.mxu0 0
        %713 = vmatmul.mubr.bf16.gmra.mrb[0].mxu0 %v556
        %v714 = vpop.f32.mrb[0].mxu0
        %v715 = vadd.f32 0.0, %v714
        %v716 = vpop.f32.mrb[0].mxu0
        %v717 = vadd.f32 0.0, %v716
        %v718 = vpop.f32.mrb[0].mxu0
        %v719 = vadd.f32 0.0, %v718
        %v720 = vpop.f32.mrb[0].mxu0
        %v721 = vadd.f32 0.0, %v720
        %722 = vmatprep.mubr.bf16.mxu0 0
        %723 = vmatmul.mubr.bf16.gmra.mrb[0].mxu0 %v559
        %v724 = vpop.f32.mrb[0].mxu0
        %v725 = vadd.f32 0.0, %v724
        %v726 = vpop.f32.mrb[0].mxu0
        %v727 = vadd.f32 0.0, %v726
        %v728 = vpop.f32.mrb[0].mxu0
        %v729 = vadd.f32 0.0, %v728
        %v730 = vpop.f32.mrb[0].mxu0
        %v731 = vadd.f32 0.0, %v730
        %732 = vmatprep.mubr.bf16.mxu0 0
        %733 = vmatmul.mubr.bf16.gmra.mrb[0].mxu0 %v562
        %v734 = vpop.f32.mrb[0].mxu0
        %v735 = vadd.f32 0.0, %v734
        %v736 = vpop.f32.mrb[0].mxu0
        %v737 = vadd.f32 0.0, %v736
        %v738 = vpop.f32.mrb[0].mxu0
        %v739 = vadd.f32 0.0, %v738
        %v740 = vpop.f32.mrb[0].mxu0
        %v741 = vadd.f32 0.0, %v740
        %742 = vmatprep.mubr.bf16.mxu0 0
        %743 = vmatmul.mubr.bf16.gmra.mrb[0].mxu0 %v565
        %v744 = vpop.f32.mrb[0].mxu0
        %v745 = vadd.f32 0.0, %v744
        %v746 = vpop.f32.mrb[0].mxu0
        %v747 = vadd.f32 0.0, %v746
        %v748 = vpop.f32.mrb[0].mxu0
        %v749 = vadd.f32 0.0, %v748
        %v750 = vpop.f32.mrb[0].mxu0
        %v751 = vadd.f32 0.0, %v750
        %752 = vmatprep.mubr.bf16.mxu0 0
        %753 = vmatmul.mubr.bf16.gmra.mrb[0].mxu0 %v568
        %v754 = vpop.f32.mrb[0].mxu0
        %v755 = vadd.f32 0.0, %v754
        %v756 = vpop.f32.mrb[0].mxu0
        %v757 = vadd.f32 0.0, %v756
        %v758 = vpop.f32.mrb[0].mxu0
        %v759 = vadd.f32 0.0, %v758
        %v760 = vpop.f32.mrb[0].mxu0
        %v761 = vadd.f32 0.0, %v760
        %762 = vdwg.mxu0
        %v763 = vmax.f32 %v605, %v607
        %764 = vmax.xlane.f32.xlu0 %v763
        %v765 = vpop.xlane.xlu0 %764
        %v766 = vmax.f32 %v609, %v611
        %767 = vmax.xlane.f32.xlu0 %v766
        %v768 = vpop.xlane.xlu0 %767
        %v769 = vmax.f32 %v615, %v617
        %770 = vmax.xlane.f32.xlu0 %v769
        %v771 = vpop.xlane.xlu0 %770
        %v772 = vmax.f32 %v619, %v621
        %773 = vmax.xlane.f32.xlu0 %v772
        %v774 = vpop.xlane.xlu0 %773
        %v775 = vmax.f32 %v625, %v627
        %776 = vmax.xlane.f32.xlu0 %v775
        %v777 = vpop.xlane.xlu0 %776
        %v778 = vmax.f32 %v629, %v631
        %779 = vmax.xlane.f32.xlu0 %v778
        %v780 = vpop.xlane.xlu0 %779
        %v781 = vmax.f32 %v635, %v637
        %782 = vmax.xlane.f32.xlu0 %v781
        %v783 = vpop.xlane.xlu0 %782
        %v784 = vmax.f32 %v639, %v641
        %785 = vmax.xlane.f32.xlu0 %v784
        %v786 = vpop.xlane.xlu0 %785
        %v787 = vmax.f32 %v645, %v647
        %788 = vmax.xlane.f32.xlu0 %v787
        %v789 = vpop.xlane.xlu0 %788
        %v790 = vmax.f32 %v649, %v651
        %791 = vmax.xlane.f32.xlu0 %v790
        %v792 = vpop.xlane.xlu0 %791
        %v793 = vmax.f32 %v655, %v657
        %794 = vmax.xlane.f32.xlu0 %v793
        %v795 = vpop.xlane.xlu0 %794
        %v796 = vmax.f32 %v659, %v661
        %797 = vmax.xlane.f32.xlu0 %v796
        %v798 = vpop.xlane.xlu0 %797
        %v799 = vmax.f32 %v665, %v667
        %800 = vmax.xlane.f32.xlu0 %v799
        %v801 = vpop.xlane.xlu0 %800
        %v802 = vmax.f32 %v669, %v671
        %803 = vmax.xlane.f32.xlu0 %v802
        %v804 = vpop.xlane.xlu0 %803
        %v805 = vmax.f32 %v675, %v677
        %806 = vmax.xlane.f32.xlu0 %v805
        %v807 = vpop.xlane.xlu0 %806
        %v808 = vmax.f32 %v679, %v681
        %809 = vmax.xlane.f32.xlu0 %v808
        %v810 = vpop.xlane.xlu0 %809
        %v811 = vmax.f32 %v685, %v687
        %812 = vmax.xlane.f32.xlu0 %v811
        %v813 = vpop.xlane.xlu0 %812
        %v814 = vmax.f32 %v689, %v691
        %815 = vmax.xlane.f32.xlu0 %v814
        %v816 = vpop.xlane.xlu0 %815
        %v817 = vmax.f32 %v695, %v697
        %818 = vmax.xlane.f32.xlu0 %v817
        %v819 = vpop.xlane.xlu0 %818
        %v820 = vmax.f32 %v699, %v701
        %821 = vmax.xlane.f32.xlu0 %v820
        %v822 = vpop.xlane.xlu0 %821
        %v823 = vmax.f32 %v705, %v707
        %824 = vmax.xlane.f32.xlu0 %v823
        %v825 = vpop.xlane.xlu0 %824
        %v826 = vmax.f32 %v709, %v711
        %827 = vmax.xlane.f32.xlu0 %v826
        %v828 = vpop.xlane.xlu0 %827
        %v829 = vmax.f32 %v715, %v717
        %830 = vmax.xlane.f32.xlu0 %v829
        %v831 = vpop.xlane.xlu0 %830
        %v832 = vmax.f32 %v719, %v721
        %833 = vmax.xlane.f32.xlu0 %v832
        %v834 = vpop.xlane.xlu0 %833
        %v835 = vmax.f32 %v725, %v727
        %836 = vmax.xlane.f32.xlu0 %v835
        %v837 = vpop.xlane.xlu0 %836
        %v838 = vmax.f32 %v729, %v731
        %839 = vmax.xlane.f32.xlu0 %v838
        %v840 = vpop.xlane.xlu0 %839
        %v841 = vmax.f32 %v735, %v737
        %842 = vmax.xlane.f32.xlu0 %v841
        %v843 = vpop.xlane.xlu0 %842
        %v844 = vmax.f32 %v739, %v741
        %845 = vmax.xlane.f32.xlu0 %v844
        %v846 = vpop.xlane.xlu0 %845
        %v847 = vmax.f32 %v745, %v747
        %848 = vmax.xlane.f32.xlu0 %v847
        %v849 = vpop.xlane.xlu0 %848
        %v850 = vmax.f32 %v749, %v751
        %851 = vmax.xlane.f32.xlu0 %v850
        %v852 = vpop.xlane.xlu0 %851
        %v853 = vmax.f32 %v755, %v757
        %854 = vmax.xlane.f32.xlu0 %v853
        %v855 = vpop.xlane.xlu0 %854
        %v856 = vmax.f32 %v759, %v761
        %857 = vmax.xlane.f32.xlu0 %v856
        %v858 = vpop.xlane.xlu0 %857
        %v859 = vsub.f32 %v605, %v765
        %v860 = vsub.f32 %v607, %v765
        %v861 = vsub.f32 %v609, %v768
        %v862 = vsub.f32 %v611, %v768
        %v863 = vsub.f32 %v615, %v771
        %v864 = vsub.f32 %v617, %v771
        %v865 = vsub.f32 %v619, %v774
        %v866 = vsub.f32 %v621, %v774
        %v867 = vsub.f32 %v625, %v777
        %v868 = vsub.f32 %v627, %v777
        %v869 = vsub.f32 %v629, %v780
        %v870 = vsub.f32 %v631, %v780
        %v871 = vsub.f32 %v635, %v783
        %v872 = vsub.f32 %v637, %v783
        %v873 = vsub.f32 %v639, %v786
        %v874 = vsub.f32 %v641, %v786
        %v875 = vsub.f32 %v645, %v789
        %v876 = vsub.f32 %v647, %v789
        %v877 = vsub.f32 %v649, %v792
        %v878 = vsub.f32 %v651, %v792
        %v879 = vsub.f32 %v655, %v795
        %v880 = vsub.f32 %v657, %v795
        %v881 = vsub.f32 %v659, %v798
        %v882 = vsub.f32 %v661, %v798
        %v883 = vsub.f32 %v665, %v801
        %v884 = vsub.f32 %v667, %v801
        %v885 = vsub.f32 %v669, %v804
        %v886 = vsub.f32 %v671, %v804
        %v887 = vsub.f32 %v675, %v807
        %v888 = vsub.f32 %v677, %v807
        %v889 = vsub.f32 %v679, %v810
        %v890 = vsub.f32 %v681, %v810
        %v891 = vsub.f32 %v685, %v813
        %v892 = vsub.f32 %v687, %v813
        %v893 = vsub.f32 %v689, %v816
        %v894 = vsub.f32 %v691, %v816
        %v895 = vsub.f32 %v695, %v819
        %v896 = vsub.f32 %v697, %v819
        %v897 = vsub.f32 %v699, %v822
        %v898 = vsub.f32 %v701, %v822
        %v899 = vsub.f32 %v705, %v825
        %v900 = vsub.f32 %v707, %v825
        %v901 = vsub.f32 %v709, %v828
        %v902 = vsub.f32 %v711, %v828
        %v903 = vsub.f32 %v715, %v831
        %v904 = vsub.f32 %v717, %v831
        %v905 = vsub.f32 %v719, %v834
        %v906 = vsub.f32 %v721, %v834
        %v907 = vsub.f32 %v725, %v837
        %v908 = vsub.f32 %v727, %v837
        %v909 = vsub.f32 %v729, %v840
        %v910 = vsub.f32 %v731, %v840
        %v911 = vsub.f32 %v735, %v843
        %v912 = vsub.f32 %v737, %v843
        %v913 = vsub.f32 %v739, %v846
        %v914 = vsub.f32 %v741, %v846
        %v915 = vsub.f32 %v745, %v849
        %v916 = vsub.f32 %v747, %v849
        %v917 = vsub.f32 %v749, %v852
        %v918 = vsub.f32 %v751, %v852
        %v919 = vsub.f32 %v755, %v855
        %v920 = vsub.f32 %v757, %v855
        %v921 = vsub.f32 %v759, %v858
        %v922 = vsub.f32 %v761, %v858
        %v923 = vmul.f32 %v859, 1.442695
        %v924 = vpow.pop %v923
        %v925 = vmul.f32 %v860, 1.442695
        %v926 = vpow.pop %v925
        %v927 = vmul.f32 %v861, 1.442695
        %v928 = vpow.pop %v927
        %v929 = vmul.f32 %v862, 1.442695
        %v930 = vpow.pop %v929
        %v931 = vmul.f32 %v863, 1.442695
        %v932 = vpow.pop %v931
        %v933 = vmul.f32 %v864, 1.442695
        %v934 = vpow.pop %v933
        %v935 = vmul.f32 %v865, 1.442695
        %v936 = vpow.pop %v935
        %v937 = vmul.f32 %v866, 1.442695
        %v938 = vpow.pop %v937
        %v939 = vmul.f32 %v867, 1.442695
        %v940 = vpow.pop %v939
        %v941 = vmul.f32 %v868, 1.442695
        %v942 = vpow.pop %v941
        %v943 = vmul.f32 %v869, 1.442695
        %v944 = vpow.pop %v943
        %v945 = vmul.f32 %v870, 1.442695
        %v946 = vpow.pop %v945
        %v947 = vmul.f32 %v871, 1.442695
        %v948 = vpow.pop %v947
        %v949 = vmul.f32 %v872, 1.442695
        %v950 = vpow.pop %v949
        %v951 = vmul.f32 %v873, 1.442695
        %v952 = vpow.pop %v951
        %v953 = vmul.f32 %v874, 1.442695
        %v954 = vpow.pop %v953
        %v955 = vmul.f32 %v875, 1.442695
        %v956 = vpow.pop %v955
        %v957 = vmul.f32 %v876, 1.442695
        %v958 = vpow.pop %v957
        %v959 = vmul.f32 %v877, 1.442695
        %v960 = vpow.pop %v959
        %v961 = vmul.f32 %v878, 1.442695
        %v962 = vpow.pop %v961
        %v963 = vmul.f32 %v879, 1.442695
        %v964 = vpow.pop %v963
        %v965 = vmul.f32 %v880, 1.442695
        %v966 = vpow.pop %v965
        %v967 = vmul.f32 %v881, 1.442695
        %v968 = vpow.pop %v967
        %v969 = vmul.f32 %v882, 1.442695
        %v970 = vpow.pop %v969
        %v971 = vmul.f32 %v883, 1.442695
        %v972 = vpow.pop %v971
        %v973 = vmul.f32 %v884, 1.442695
        %v974 = vpow.pop %v973
        %v975 = vmul.f32 %v885, 1.442695
        %v976 = vpow.pop %v975
        %v977 = vmul.f32 %v886, 1.442695
        %v978 = vpow.pop %v977
        %v979 = vmul.f32 %v887, 1.442695
        %v980 = vpow.pop %v979
        %v981 = vmul.f32 %v888, 1.442695
        %v982 = vpow.pop %v981
        %v983 = vmul.f32 %v889, 1.442695
        %v984 = vpow.pop %v983
        %v985 = vmul.f32 %v890, 1.442695
        %v986 = vpow.pop %v985
        %v987 = vmul.f32 %v891, 1.442695
        %v988 = vpow.pop %v987
        %v989 = vmul.f32 %v892, 1.442695
        %v990 = vpow.pop %v989
        %v991 = vmul.f32 %v893, 1.442695
        %v992 = vpow.pop %v991
        %v993 = vmul.f32 %v894, 1.442695
        %v994 = vpow.pop %v993
        %v995 = vmul.f32 %v895, 1.442695
        %v996 = vpow.pop %v995
        %v997 = vmul.f32 %v896, 1.442695
        %v998 = vpow.pop %v997
        %v999 = vmul.f32 %v897, 1.442695
        %v1000 = vpow.pop %v999
        %v1001 = vmul.f32 %v898, 1.442695
        %v1002 = vpow.pop %v1001
        %v1003 = vmul.f32 %v899, 1.442695
        %v1004 = vpow.pop %v1003
        %v1005 = vmul.f32 %v900, 1.442695
        %v1006 = vpow.pop %v1005
        %v1007 = vmul.f32 %v901, 1.442695
        %v1008 = vpow.pop %v1007
        %v1009 = vmul.f32 %v902, 1.442695
        %v1010 = vpow.pop %v1009
        %v1011 = vmul.f32 %v903, 1.442695
        %v1012 = vpow.pop %v1011
        %v1013 = vmul.f32 %v904, 1.442695
        %v1014 = vpow.pop %v1013
        %v1015 = vmul.f32 %v905, 1.442695
        %v1016 = vpow.pop %v1015
        %v1017 = vmul.f32 %v906, 1.442695
        %v1018 = vpow.pop %v1017
        %v1019 = vmul.f32 %v907, 1.442695
        %v1020 = vpow.pop %v1019
        %v1021 = vmul.f32 %v908, 1.442695
        %v1022 = vpow.pop %v1021
        %v1023 = vmul.f32 %v909, 1.442695
        %v1024 = vpow.pop %v1023
        %v1025 = vmul.f32 %v910, 1.442695
        %v1026 = vpow.pop %v1025
        %v1027 = vmul.f32 %v911, 1.442695
        %v1028 = vpow.pop %v1027
        %v1029 = vmul.f32 %v912, 1.442695
        %v1030 = vpow.pop %v1029
        %v1031 = vmul.f32 %v913, 1.442695
        %v1032 = vpow.pop %v1031
        %v1033 = vmul.f32 %v914, 1.442695
        %v1034 = vpow.pop %v1033
        %v1035 = vmul.f32 %v915, 1.442695
        %v1036 = vpow.pop %v1035
        %v1037 = vmul.f32 %v916, 1.442695
        %v1038 = vpow.pop %v1037
        %v1039 = vmul.f32 %v917, 1.442695
        %v1040 = vpow.pop %v1039
        %v1041 = vmul.f32 %v918, 1.442695
        %v1042 = vpow.pop %v1041
        %v1043 = vmul.f32 %v919, 1.442695
        %v1044 = vpow.pop %v1043
        %v1045 = vmul.f32 %v920, 1.442695
        %v1046 = vpow.pop %v1045
        %v1047 = vmul.f32 %v921, 1.442695
        %v1048 = vpow.pop %v1047
        %v1049 = vmul.f32 %v922, 1.442695
        %v1050 = vpow.pop %v1049
        %v1051 = vpack.c.bf16 %v928, %v924
        %v1052 = vpack.c.bf16 %v930, %v926
        %v1053 = vpack.c.bf16 %v936, %v932
        %v1054 = vpack.c.bf16 %v938, %v934
        %v1055 = vpack.c.bf16 %v944, %v940
        %v1056 = vpack.c.bf16 %v946, %v942
        %v1057 = vpack.c.bf16 %v952, %v948
        %v1058 = vpack.c.bf16 %v954, %v950
        %v1059 = vpack.c.bf16 %v960, %v956
        %v1060 = vpack.c.bf16 %v962, %v958
        %v1061 = vpack.c.bf16 %v968, %v964
        %v1062 = vpack.c.bf16 %v970, %v966
        %v1063 = vpack.c.bf16 %v976, %v972
        %v1064 = vpack.c.bf16 %v978, %v974
        %v1065 = vpack.c.bf16 %v984, %v980
        %v1066 = vpack.c.bf16 %v986, %v982
        %v1067 = vpack.c.bf16 %v992, %v988
        %v1068 = vpack.c.bf16 %v994, %v990
        %v1069 = vpack.c.bf16 %v1000, %v996
        %v1070 = vpack.c.bf16 %v1002, %v998
        %v1071 = vpack.c.bf16 %v1008, %v1004
        %v1072 = vpack.c.bf16 %v1010, %v1006
        %v1073 = vpack.c.bf16 %v1016, %v1012
        %v1074 = vpack.c.bf16 %v1018, %v1014
        %v1075 = vpack.c.bf16 %v1024, %v1020
        %v1076 = vpack.c.bf16 %v1026, %v1022
        %v1077 = vpack.c.bf16 %v1032, %v1028
        %v1078 = vpack.c.bf16 %v1034, %v1030
        %v1079 = vpack.c.bf16 %v1040, %v1036
        %v1080 = vpack.c.bf16 %v1042, %v1038
        %v1081 = vpack.c.bf16 %v1048, %v1044
        %v1082 = vpack.c.bf16 %v1050, %v1046
        %v1083 = vld [vmem:[%s321] sm:$0xf]
        %v1086 = vunpack.c.l.s4 1983009808
        %v1087 = vunpack.c.0.s8 %v1086
        %v1088 = vlaneseq
        %v1089 = vshrl.u32 %v1088, 7
        %v1090 = vsub.s32 %v1087, %v1089
        %v1091 = vrot.slane %v1083, %v1090
        %v1092 = vcombine.high %v1091, %v1091
        %1095 = vmatprep.subr.bf16.mxu0 %v1052
        %1096 = vmatpush1.bf16.xpose.msra.mxu0 %v1051
        %1097 = vmatprep.subr.bf16.mxu0 %v1054
        %1098 = vmatpush1.bf16.xpose.msra.mxu0 %v1053
        %1099 = vmatprep.subr.bf16.mxu0 %v1056
        %1100 = vmatpush1.bf16.xpose.msra.mxu0 %v1055
        %1101 = vmatprep.subr.bf16.mxu0 %v1058
        %1102 = vmatpush1.bf16.xpose.msra.mxu0 %v1057
        %1103 = vmatprep.subr.bf16.mxu0 %v1060
        %1104 = vmatpush1.bf16.xpose.msra.mxu0 %v1059
        %1105 = vmatprep.subr.bf16.mxu0 %v1062
        %1106 = vmatpush1.bf16.xpose.msra.mxu0 %v1061
        %1107 = vmatprep.subr.bf16.mxu0 %v1064
        %1108 = vmatpush1.bf16.xpose.msra.mxu0 %v1063
        %1109 = vmatprep.subr.bf16.mxu0 %v1066
        %1110 = vmatpush1.bf16.xpose.msra.mxu0 %v1065
        %1111 = vmatprep.subr.bf16.mxu0 %v1068
        %1112 = vmatpush1.bf16.xpose.msra.mxu0 %v1067
        %1113 = vmatprep.subr.bf16.mxu0 %v1070
        %1114 = vmatpush1.bf16.xpose.msra.mxu0 %v1069
        %1115 = vmatprep.subr.bf16.mxu0 %v1072
        %1116 = vmatpush1.bf16.xpose.msra.mxu0 %v1071
        %1117 = vmatprep.subr.bf16.mxu0 %v1074
        %1118 = vmatpush1.bf16.xpose.msra.mxu0 %v1073
        %1119 = vmatprep.subr.bf16.mxu0 %v1076
        %1120 = vmatpush1.bf16.xpose.msra.mxu0 %v1075
        %1121 = vmatprep.subr.bf16.mxu0 %v1078
        %1122 = vmatpush1.bf16.xpose.msra.mxu0 %v1077
        %1123 = vmatprep.subr.bf16.mxu0 %v1080
        %1124 = vmatpush1.bf16.xpose.msra.mxu0 %v1079
        %1125 = vmatprep.subr.bf16.mxu0 %v1082
        %1126 = vmatpush1.bf16.xpose.msra.mxu0 %v1081
        %1127 = vmatprep.mubr.bf16.mxu0 %v1092
        %1128 = vmatmul.mubr.bf16.gmra.mrb[0].mxu0 %v1091
        %v1129 = vpop.f32.mrb[0].mxu0
        %v1130 = vadd.f32 0.0, %v1129
        %v1131 = vpop.f32.mrb[0].mxu0
        %v1132 = vadd.f32 0.0, %v1131
        %v1133 = vpop.f32.mrb[0].mxu0
        %v1134 = vpop.f32.mrb[0].mxu0
        %1135 = vdwg.mxu0
        %v1136 = vrcp.pop %v1130
        %v1137 = vrcp.pop %v1132
        %v1138 = vlaneseq
        %v1139 = vshrl.u32 %v1138, 7
        %v1140 = vsub.s32 2, %v1139
        %v1141 = vrot.slane %v1136, %v1140
        %v1142 = vlaneseq
        %v1143 = vshrl.u32 %v1142, 7
        %v1144 = vsub.s32 2, %v1143
        %v1145 = vrot.slane %v1137, %v1144
        %v1146 = vmul.f32 %v1130, %v1141
        %v1147 = vmul.f32 %v1132, %v1145
        %v1150 = vcombine.low %v1146, %v1147
        %v1152 = vunpack.c.l.s4 1983009808
        %v1153 = vunpack.c.0.s8 %v1152
        %v1154 = vlaneseq
        %v1155 = vshrl.u32 %v1154, 7
        %v1156 = vsub.s32 %v1153, %v1155
        %v1157 = vrot.slane %v1150, %v1156
        %1159 = vst [vmem:[%s315] sm:$0xf] %v1157
        %s1160 = sand.u32 %s169, 1
        %s1161 = scalar_lea.sflag [#allocation4], %s1160
        %s1162 = sand.u32 %s169, 1
        %s1163 = smul.addr %s1162, 4
        %s1164 = scalar_lea.vmem [#allocation7], %s1163
        // Predicated region
        $region49: #{tpu_custom_call.1} parent=39 // pred_check
          %p1165 = pneg %p179
        $region50: #{tpu_custom_call.1} parent=39 // pred_check_branch
          %1167 = sbr.rel (%p1165) target = $region52
        $region51: #{tpu_custom_call.1} parent=39 // pred_region
          %s1168 = smul.u32 2, %s30
          %s1170 = ssub.s32 64, 64
          %1171 = vsyncadd %s1161, %s1170
          %s1172 = smul.addr %s29, 2
          %s1173 = sadd.s32 %s1168, %s1172
          %s1174 = smul.addr %s1173, 32
          %s1175 = scalar_lea.hbm %s5, %s1174
          %s1177 = sshll.u32 %s1164, 4
          %s1178 = int_to_ptr.vmem [resolvable:$true] %s1177
          %1180 = dma.vmem_to_hbm [thread:$0]  %s1178, 64, %s1175, %s1161
        $region52: #{tpu_custom_call.1} parent=39 // pred_fallthru
          _
      $region40: #{tpu_custom_call.1} parent=5 // pred_fallthru
        _
      %p1181 = scmp.le.s32.totalorder 2, %s20
      // Predicated region
      $region53: #{tpu_custom_call.1} parent=5 // pred_check
        %p1182 = pneg %p1181
      $region54: #{tpu_custom_call.1} parent=5 // pred_check_branch
        %1184 = sbr.rel (%p1182) target = $region56
      $region55: #{tpu_custom_call.1} parent=5 // pred_region
        %s1185 = ssub.s32 %s20, 2
        // Predicated region
        $region57: #{tpu_custom_call.1} parent=55 // pred_check
          %p1186 = pneg %p185
        $region58: #{tpu_custom_call.1} parent=55 // pred_check_branch
          %1188 = sbr.rel (%p1186) target = $region60
        $region59: #{tpu_custom_call.1} parent=55 // pred_region
          %s1189 = sand.u32 %s170, 1
          %s1190 = scalar_lea.sflag [#allocation4], %s1189
          %s1191 = sand.u32 %s170, 1
          %s1192 = smul.addr %s1191, 4
          %s1193 = scalar_lea.vmem [#allocation7], %s1192
          %1194 = dma.done %s1190, 64
        $region60: #{tpu_custom_call.1} parent=55 // pred_fallthru
          _
      $region56: #{tpu_custom_call.1} parent=5 // pred_fallthru
        _
    $region6: #{tpu_custom_call.1} parent=1 // loop_footer
      %s24 = sadd.s32 1, %s20
    $region7: #{tpu_custom_call.1} parent=1 // loop_footer_branch
      %19 = sbr.rel target = $region3
    $region8: #{tpu_custom_call.1} parent=1 // loop_exit
      _
    %1195 = vsyncpa [#allocation3], 1
    %s1196 = scalar_lea.sflag [#allocation3], 1
    %1197 = vsyncpa %s1196, 1
    %1198 = vsyncpa [#allocation6], 1
    %s1199 = scalar_lea.sflag [#allocation6], 1
    %1200 = vsyncpa %s1199, 1
    %1201 = vsyncpa [#allocation4], 1
    %s1202 = scalar_lea.sflag [#allocation4], 1
    %1203 = vsyncpa %s1202, 1

</llo_original>
